<compile_context>
chip_gen: v6e
topology: v6e:2x2x1
jax: 0.10.0
libtpu: 0.0.40
codegen_flags: <defaults>
</compile_context>

<pallas_src>
import functools

import jax
import jax.numpy as jnp
import numpy as np
from jax.experimental import pallas as pl
from jax.experimental.pallas import tpu as pltpu

LANES = 128
MAX_BLOCK_ROWS = 2048  # 2048 x 128 x 4B = 1 MiB per f32 pipeline buffer


# --------------------------------------------------------------------------- #
# Kernels
# --------------------------------------------------------------------------- #
def _sum_kernel(x_ref, sum_ref):
    """Tiled global sum: accumulate into a resident (1,1) SMEM output."""
    @pl.when(pl.program_id(0) == 0)
    def _():
        sum_ref[0, 0] = jnp.float32(0.0)

    sum_ref[0, 0] += jnp.sum(x_ref[...].astype(jnp.float32))


def _two_sum_kernel(f_ref, r_ref, sf_ref, sr_ref):
    """Fused tiled sums of two same-layout tensors (one launch, one HBM pass each)."""
    @pl.when(pl.program_id(0) == 0)
    def _():
        sf_ref[0, 0] = jnp.float32(0.0)
        sr_ref[0, 0] = jnp.float32(0.0)

    sf_ref[0, 0] += jnp.sum(f_ref[...].astype(jnp.float32))
    sr_ref[0, 0] += jnp.sum(r_ref[...].astype(jnp.float32))


# --------------------------------------------------------------------------- #
# Host-side helpers
# --------------------------------------------------------------------------- #
def _round_up(a, b):
    return (a + b - 1) // b * b


def _prep(x):
    """Flatten + zero-pad to a (rows_p, 128) layout whose rows divide block_rows."""
    n = x.size
    flat = x.reshape(-1)
    rows = _round_up(max(n, 1), LANES) // LANES
    block_rows = min(MAX_BLOCK_ROWS, _round_up(rows, 8))  # (8,128) friendly
    rows_p = _round_up(rows, block_rows)
    pad = rows_p * LANES - n
    if pad:
        flat = jnp.pad(flat, (0, pad))  # zeros do not perturb the sum
    return flat.reshape(rows_p, LANES), block_rows, n


def _compiler_params():
    return pltpu.CompilerParams(
        dimension_semantics=("arbitrary",),      # reduction axis
        vmem_limit_bytes=32 * 1024 * 1024,       # explicit, portable to v7x
    )


def _pallas_sum(x2, block_rows):
    grid = (x2.shape[0] // block_rows,)
    nbytes = x2.size * x2.dtype.itemsize
    return pl.pallas_call(
        _sum_kernel,
        out_shape=jax.ShapeDtypeStruct((1, 1), jnp.float32),
        grid=grid,
        in_specs=[pl.BlockSpec((block_rows, LANES), lambda i: (i, 0))],
        out_specs=pl.BlockSpec((1, 1), lambda i: (0, 0), memory_space=pltpu.SMEM),
        compiler_params=_compiler_params(),
        cost_estimate=pl.CostEstimate(
            flops=x2.size, transcendentals=0, bytes_accessed=nbytes + 4),
    )(x2)


def _pallas_two_sums(f2, r2, block_rows):
    grid = (f2.shape[0] // block_rows,)
    nbytes = f2.size * f2.dtype.itemsize + r2.size * r2.dtype.itemsize
    return pl.pallas_call(
        _two_sum_kernel,
        out_shape=(jax.ShapeDtypeStruct((1, 1), jnp.float32),
                   jax.ShapeDtypeStruct((1, 1), jnp.float32)),
        grid=grid,
        in_specs=[pl.BlockSpec((block_rows, LANES), lambda i: (i, 0)),
                  pl.BlockSpec((block_rows, LANES), lambda i: (i, 0))],
        out_specs=(pl.BlockSpec((1, 1), lambda i: (0, 0), memory_space=pltpu.SMEM),
                   pl.BlockSpec((1, 1), lambda i: (0, 0), memory_space=pltpu.SMEM)),
        compiler_params=_compiler_params(),
        cost_estimate=pl.CostEstimate(
            flops=f2.size + r2.size, transcendentals=0, bytes_accessed=nbytes + 8),
    )(f2, r2)


# --------------------------------------------------------------------------- #
# Public API — mirrors WGAN.forward(fake, real=None, mode='D')
# --------------------------------------------------------------------------- #
def wgan_loss(fake, real=None, mode="D"):
    assert mode in ("D", "G")
    f2, f_block, nf = _prep(fake)

    if mode == "G":
        assert real is None
        sf = _pallas_sum(f2, f_block)
        return -(sf[0, 0] / jnp.float32(nf))

    assert real is not None
    r2, r_block, nr = _prep(real)
    if f2.shape == r2.shape and f2.dtype == r2.dtype and f_block == r_block:
        sf, sr = _pallas_two_sums(f2, r2, f_block)   # single fused launch
    else:
        sf = _pallas_sum(f2, f_block)
        sr = _pallas_sum(r2, r_block)
    return sf[0, 0] / jnp.float32(nf) - sr[0, 0] / jnp.float32(nr)


def _wgan_ref(fake, real=None, mode="D"):
    """Pure-jnp reference mirroring the PyTorch forward."""
    if mode == "D":
        return jnp.mean(fake) - jnp.mean(real)
    return -jnp.mean(fake)


# --------------------------------------------------------------------------- #
# Self-test
# --------------------------------------------------------------------------- #
if __name__ == "__main__":
    key = jax.random.PRNGKey(0)
    k1, k2 = jax.random.split(key)
    B, C, H, W = 2, 1, 16, 16
    fake = jax.random.normal(k1, (B, C, H, W), dtype=jnp.float32)
    real = jax.random.normal(k2, (B, C, H, W), dtype=jnp.float32)

    d_loss = jax.block_until_ready(wgan_loss(fake, real, mode="D"))
    g_loss = jax.block_until_ready(wgan_loss(fake, mode="G"))

    np.testing.assert_allclose(
        np.asarray(d_loss), np.asarray(_wgan_ref(fake, real, mode="D")),
        rtol=1e-6, atol=1e-6)
    np.testing.assert_allclose(
        np.asarray(g_loss), np.asarray(_wgan_ref(fake, mode="G")),
        rtol=1e-6, atol=1e-6)

    print("KERNEL_OK")
</pallas_src>

<mosaic_0001>
module attributes {stable_mosaic.version = 11 : i64} {
  func.func @_two_sum_kernel(%arg0: i32, %arg1: memref<8x128xf32, #tpu.memory_space<vmem>>, %arg2: memref<8x128xf32, #tpu.memory_space<vmem>>, %arg3: memref<1x1xf32, #tpu.memory_space<smem>>, %arg4: memref<1x1xf32, #tpu.memory_space<smem>>) attributes {dimension_semantics = [#tpu.dimension_semantics<arbitrary>], iteration_bounds = array<i64: 1>, scalar_prefetch = 0 : i64, scratch_operands = 0 : i64, tpu.core_type = #tpu.core_type<tc>, window_params = [{transform_indices = @transform_0, window_bounds = array<i64: 8, 128>}, {transform_indices = @transform_1, window_bounds = array<i64: 8, 128>}, {transform_indices = @transform_2, window_bounds = array<i64: 1, 1>}, {transform_indices = @transform_3, window_bounds = array<i64: 1, 1>}]} {
    %c0_i32 = arith.constant 0 : i32
    %0 = arith.cmpi eq, %arg0, %c0_i32 : i32
    %1 = arith.extui %0 : i1 to i32
    %c0_i32_0 = arith.constant 0 : i32
    %2 = arith.cmpi ne, %1, %c0_i32_0 : i32
    scf.if %2 {
      %cst_13 = arith.constant 0.000000e+00 : f32
      %c0_14 = arith.constant 0 : index
      %c0_15 = arith.constant 0 : index
      %19 = memref.load %arg3[%c0_14, %c0_15] : memref<1x1xf32, #tpu.memory_space<smem>>
      memref.store %cst_13, %arg3[%c0_14, %c0_15] : memref<1x1xf32, #tpu.memory_space<smem>>
      %cst_16 = arith.constant 0.000000e+00 : f32
      %c0_17 = arith.constant 0 : index
      %c0_18 = arith.constant 0 : index
      %20 = memref.load %arg4[%c0_17, %c0_18] : memref<1x1xf32, #tpu.memory_space<smem>>
      memref.store %cst_16, %arg4[%c0_17, %c0_18] : memref<1x1xf32, #tpu.memory_space<smem>>
    } else {
    }
    %c0 = arith.constant 0 : index
    %c0_1 = arith.constant 0 : index
    %3 = memref.load %arg3[%c0, %c0_1] : memref<1x1xf32, #tpu.memory_space<smem>>
    %c0_2 = arith.constant 0 : index
    %c0_3 = arith.constant 0 : index
    %4 = vector.load %arg1[%c0_2, %c0_3] : memref<8x128xf32, #tpu.memory_space<vmem>>, vector<8x128xf32>
    %5 = vector.shape_cast %4 : vector<8x128xf32> to vector<1x8x128xf32>
    %cst = arith.constant dense<0.000000e+00> : vector<1xf32>
    %6 = vector.multi_reduction <add>, %5, %cst [1, 2] : vector<1x8x128xf32> to vector<1xf32>
    %7 = vector.shape_cast %6 : vector<1xf32> to vector<1x1x1xf32>
    %8 = vector.extract %7[0, 0, 0] : f32 from vector<1x1x1xf32>
    %9 = arith.addf %3, %8 : f32
    %c0_4 = arith.constant 0 : index
    %c0_5 = arith.constant 0 : index
    %10 = memref.load %arg3[%c0_4, %c0_5] : memref<1x1xf32, #tpu.memory_space<smem>>
    memref.store %9, %arg3[%c0_4, %c0_5] : memref<1x1xf32, #tpu.memory_space<smem>>
    %c0_6 = arith.constant 0 : index
    %c0_7 = arith.constant 0 : index
    %11 = memref.load %arg4[%c0_6, %c0_7] : memref<1x1xf32, #tpu.memory_space<smem>>
    %c0_8 = arith.constant 0 : index
    %c0_9 = arith.constant 0 : index
    %12 = vector.load %arg2[%c0_8, %c0_9] : memref<8x128xf32, #tpu.memory_space<vmem>>, vector<8x128xf32>
    %13 = vector.shape_cast %12 : vector<8x128xf32> to vector<1x8x128xf32>
    %cst_10 = arith.constant dense<0.000000e+00> : vector<1xf32>
    %14 = vector.multi_reduction <add>, %13, %cst_10 [1, 2] : vector<1x8x128xf32> to vector<1xf32>
    %15 = vector.shape_cast %14 : vector<1xf32> to vector<1x1x1xf32>
    %16 = vector.extract %15[0, 0, 0] : f32 from vector<1x1x1xf32>
    %17 = arith.addf %11, %16 : f32
    %c0_11 = arith.constant 0 : index
    %c0_12 = arith.constant 0 : index
    %18 = memref.load %arg4[%c0_11, %c0_12] : memref<1x1xf32, #tpu.memory_space<smem>>
    memref.store %17, %arg4[%c0_11, %c0_12] : memref<1x1xf32, #tpu.memory_space<smem>>
    return
  }
  func.func @transform_0(%arg0: i32) -> (i32, i32) {
    %c0_i32 = arith.constant 0 : i32
    %c0_i32_0 = arith.constant 0 : i32
    return %arg0, %c0_i32 : i32, i32
  }
  func.func @transform_1(%arg0: i32) -> (i32, i32) {
    %c0_i32 = arith.constant 0 : i32
    %c0_i32_0 = arith.constant 0 : i32
    return %arg0, %c0_i32 : i32, i32
  }
  func.func @transform_2(%arg0: i32) -> (i32, i32) {
    %c0_i32 = arith.constant 0 : i32
    %c0_i32_0 = arith.constant 0 : i32
    %c0_i32_1 = arith.constant 0 : i32
    return %c0_i32, %c0_i32_0 : i32, i32
  }
  func.func @transform_3(%arg0: i32) -> (i32, i32) {
    %c0_i32 = arith.constant 0 : i32
    %c0_i32_0 = arith.constant 0 : i32
    %c0_i32_1 = arith.constant 0 : i32
    return %c0_i32, %c0_i32_0 : i32, i32
  }
}

</mosaic_0001>

<llo_original>
// kernel: tpu_custom_call.1
$region0: #{tpu_custom_call.1}
  #allocation0 [shape = 'u32[]', space=smem, size = 0x4, offset = 0x4, fixed_abs, tag = 'smem constant byte address 0x4 - core index']
  #allocation1 [shape = 'u32[144,128]{1,0:T(1,128)}', space=vmem, size = 0x12000, scoped, tag = 'internal scratch']
  %s0 = inlined_call_operand.hbm [shape: f32[8,128], index: 0, kind: input, shape index: {}]
  %s1 = inlined_call_operand.hbm [shape: f32[8,128], index: 1, kind: input, shape index: {}]
  %s2 = inlined_call_operand.hbm [shape: f32[1,1], index: 2, kind: output, shape index: {0}]
  %s3 = inlined_call_operand.hbm [shape: f32[1,1], index: 3, kind: output, shape index: {1}]
  %4 = xla_tuple %s2, %s3
  %s5 = sld [smem:[#allocation0]]
  $region38: #{tpu_custom_call.1} parent=0
    _
  %s7 = ssub.s32 1, %s5
  %s8 = scalar_select 0, %s7, %s5
  $region1: #{tpu_custom_call.1} parent=0
    #allocation2 [shape = 'u8[4096]{0}', space=vmem, size = 0x1000, scoped, tag = 'input window, operand 0, single buffered']
    #allocation3 [shape = 's32[1]{0}', space=sflag, size = 0x4, scoped, tag = 'scoped memory for tpu_custom_call.1']
    #allocation4 [shape = 's32[1]{0}', space=sflag, size = 0x4, scoped, tag = 'scoped memory for tpu_custom_call.1']
    #allocation5 [shape = 'u8[4096]{0}', space=vmem, size = 0x1000, scoped, tag = 'input window, operand 1, single buffered']
    #allocation6 [shape = 's32[1]{0}', space=sflag, size = 0x4, scoped, tag = 'scoped memory for tpu_custom_call.1']
    #allocation7 [shape = 'u8[512]{0}', space=smem, size = 0x200, scoped, tag = 'output window, operand 0, single buffered']
    #allocation8 [shape = 'u8[512]{0}', space=smem, size = 0x200, scoped, tag = 'output window, operand 1, single buffered']
    #allocation9 [shape = 's32[1]{0}', space=sflag, size = 0x4, scoped, tag = 'scoped memory for tpu_custom_call.1']
    %9 = vsyncpa [#allocation3], 0
    %10 = vsyncpa [#allocation6], 0
    %11 = vsyncpa [#allocation4], 0
    %12 = vsyncpa [#allocation9], 0
    // Predicated region
    $region2: #{tpu_custom_call.1} parent=1 // pred_check
      _
    $region3: #{tpu_custom_call.1} parent=1 // pred_check_branch
      %14 = sbr.rel (0) target = $region5
    $region4: #{tpu_custom_call.1} parent=1 // pred_region
      %s16 = ssub.s32 128, 128
      %17 = vsyncadd [#allocation3], %s16
      %s19 = sshll.u32 [#allocation2], 4
      %s20 = int_to_ptr.vmem [resolvable:$true] %s19
      %22 = dma.hbm_to_vmem [thread:$0]  %s0, 128, %s20, [#allocation3]
    $region5: #{tpu_custom_call.1} parent=1 // pred_fallthru
      _
    // Predicated region
    $region6: #{tpu_custom_call.1} parent=1 // pred_check
      _
    $region7: #{tpu_custom_call.1} parent=1 // pred_check_branch
      %24 = sbr.rel (0) target = $region9
    $region8: #{tpu_custom_call.1} parent=1 // pred_region
      %s26 = ssub.s32 128, 128
      %27 = vsyncadd [#allocation6], %s26
      %s29 = sshll.u32 [#allocation5], 4
      %s30 = int_to_ptr.vmem [resolvable:$true] %s29
      %32 = dma.hbm_to_vmem [thread:$0]  %s1, 128, %s30, [#allocation6]
    $region9: #{tpu_custom_call.1} parent=1 // pred_fallthru
      _
    // Predicated region
    $region10: #{tpu_custom_call.1} parent=1 // pred_check
      _
    $region11: #{tpu_custom_call.1} parent=1 // pred_check_branch
      %34 = sbr.rel (0) target = $region13
    $region12: #{tpu_custom_call.1} parent=1 // pred_region
      %35 = dma.done [#allocation3], 128
    $region13: #{tpu_custom_call.1} parent=1 // pred_fallthru
      _
    // Predicated region
    $region14: #{tpu_custom_call.1} parent=1 // pred_check
      _
    $region15: #{tpu_custom_call.1} parent=1 // pred_check_branch
      %37 = sbr.rel (0) target = $region17
    $region16: #{tpu_custom_call.1} parent=1 // pred_region
      %38 = dma.done [#allocation6], 128
    $region17: #{tpu_custom_call.1} parent=1 // pred_fallthru
      _
    %p39 = scmp.eq.s32.totalorder 0, 0
    // Predicated region
    $region18: #{tpu_custom_call.1} parent=1 // pred_check
      %p40 = pneg %p39
    $region19: #{tpu_custom_call.1} parent=1 // pred_check_branch
      %42 = sbr.rel (%p40) target = $region21
    $region20: #{tpu_custom_call.1} parent=1 // pred_region
      %s43 = scalar_lea.smem [#allocation7], 0
      %44 = sst [smem:[%s43]] 0.0
      %s45 = scalar_lea.smem [#allocation8], 0
      %46 = sst [smem:[%s45]] 0.0
    $region21: #{tpu_custom_call.1} parent=1 // pred_fallthru
      _
    %s47 = sld [smem:[#allocation7]]
    %v48 = vld [vmem:[#allocation2] sm:$0xff]
    %49 = vadd.xlane.f32.xlu0 %v48
    %v50 = vpop.xlane.xlu0 %49
    %v51 = vrot.slane %v50, 4
    %v52 = vadd.f32 %v50, %v51
    %v53 = vrot.slane %v52, 2
    %v54 = vadd.f32 %v52, %v53
    %v55 = vrot.slane %v54, 1
    %v56 = vadd.f32 %v54, %v55
    %s57 = vtos %v56
    %s58 = sadd.f32 %s47, %s57
    %s59 = scalar_lea.smem [#allocation7], 0
    %60 = sst [smem:[%s59]] %s58
    %s61 = sld [smem:[#allocation8]]
    %v62 = vld [vmem:[#allocation5] sm:$0xff]
    %63 = vadd.xlane.f32.xlu0 %v62
    %v64 = vpop.xlane.xlu0 %63
    %v65 = vrot.slane %v64, 4
    %v66 = vadd.f32 %v64, %v65
    %v67 = vrot.slane %v66, 2
    %v68 = vadd.f32 %v66, %v67
    %v69 = vrot.slane %v68, 1
    %v70 = vadd.f32 %v68, %v69
    %s71 = vtos %v70
    %s72 = sadd.f32 %s61, %s71
    %s73 = scalar_lea.smem [#allocation8], 0
    %74 = sst [smem:[%s73]] %s72
    // Predicated region
    $region22: #{tpu_custom_call.1} parent=1 // pred_check
      _
    $region23: #{tpu_custom_call.1} parent=1 // pred_check_branch
      %76 = sbr.rel (0) target = $region25
    $region24: #{tpu_custom_call.1} parent=1 // pred_region
      %s78 = ssub.s32 16, 16
      %79 = vsyncadd [#allocation4], %s78
      %82 = dma.smem_to_hbm [#allocation7], 16, %s2, [#allocation4]
    $region25: #{tpu_custom_call.1} parent=1 // pred_fallthru
      _
    // Predicated region
    $region26: #{tpu_custom_call.1} parent=1 // pred_check
      _
    $region27: #{tpu_custom_call.1} parent=1 // pred_check_branch
      %84 = sbr.rel (0) target = $region29
    $region28: #{tpu_custom_call.1} parent=1 // pred_region
      %s86 = ssub.s32 16, 16
      %87 = vsyncadd [#allocation9], %s86
      %90 = dma.smem_to_hbm [#allocation8], 16, %s3, [#allocation9]
    $region29: #{tpu_custom_call.1} parent=1 // pred_fallthru
      _
    // Predicated region
    $region30: #{tpu_custom_call.1} parent=1 // pred_check
      _
    $region31: #{tpu_custom_call.1} parent=1 // pred_check_branch
      %92 = sbr.rel (0) target = $region33
    $region32: #{tpu_custom_call.1} parent=1 // pred_region
      %93 = dma.done [#allocation4], 16
    $region33: #{tpu_custom_call.1} parent=1 // pred_fallthru
      _
    // Predicated region
    $region34: #{tpu_custom_call.1} parent=1 // pred_check
      _
    $region35: #{tpu_custom_call.1} parent=1 // pred_check_branch
      %95 = sbr.rel (0) target = $region37
    $region36: #{tpu_custom_call.1} parent=1 // pred_region
      %96 = dma.done [#allocation9], 16
    $region37: #{tpu_custom_call.1} parent=1 // pred_fallthru
      _
    %97 = sfence
    %98 = vsyncpa [#allocation3], 1
    %99 = vsyncpa [#allocation6], 1
    %100 = vsyncpa [#allocation4], 1
    %101 = vsyncpa [#allocation9], 1

</llo_original>
